<compile_context>
chip_gen: v7x
topology: tpu7x:2x2x1
jax: 0.10.0
libtpu: 0.0.40
codegen_flags: <defaults>
</compile_context>

<pallas_src>
import jax
import jax.numpy as jnp
import numpy as np
from jax.experimental import pallas as pl
from jax.experimental.pallas import tpu as pltpu


def _round_up(x, m):
    return (x + m - 1) // m * m


def _cdiv(a, b):
    return -(-a // b)


def _fraud_classifier_kernel(m_ref, z_ref, w1m_ref, w1z_ref, b1_ref, w2_ref,
                             b2_ref, o_ref):
    """Fused MLP tile: (W1m@m^T + W1z@z^T + b1) -> ReLU -> W2@h + b2 -> sigmoid."""
    # Activation tiles arrive in natural (TB, feature) layout; cast to bf16 for the
    # MXU (no-op if the caller already feeds bf16).
    xm = m_ref[...].astype(jnp.bfloat16)                   # (TB, Dm)
    xz = z_ref[...].astype(jnp.bfloat16)                   # (TB, Dz)

    # Hidden layer computed transposed: contract the last dim of both operands
    # (A @ B^T form, identical dimension numbers to q @ k^T in flash attention), so
    # the large activation tile is never transposed/copied and the result lands with
    # the batch in lanes.
    dn = (((1,), (1,)), ((), ()))
    ht = jax.lax.dot_general(w1m_ref[...], xm, dn,
                             preferred_element_type=jnp.float32)   # (64, TB) f32
    ht += jax.lax.dot_general(w1z_ref[...], xz, dn,
                              preferred_element_type=jnp.float32)
    ht += b1_ref[...]                                      # (64, 1) broadcast over lanes
    ht = jnp.maximum(ht, 0.0)                              # ReLU (VPU), f32

    # Output layer: (1, 64) @ (64, TB) -> (1, TB), standard matmul form.  Result is a
    # lane-dense 128*k-wide slab, so the store is an unmasked vst.
    yt = jnp.dot(w2_ref[...], ht.astype(jnp.bfloat16),
                 preferred_element_type=jnp.float32)       # (1, TB) f32
    yt += b2_ref[0]                                        # scalar bias from SMEM

    # Numerically stable sigmoid: exp argument is always <= 0 (no overflow/inf), and
    # the reciprocal denominator is in (1, 2].  Exact reciprocal - EUP/VPU filler
    # under DMA slack, and avoids the ~1e-3 error of the approximate path.
    e = jnp.exp(-jnp.abs(yt))                              # (0, 1]
    p = pl.reciprocal(1.0 + e, approx=False)               # sigmoid(|yt|)
    o_ref[...] = jnp.where(yt >= 0.0, p, 1.0 - p)


def _choose_batch_tile(B, batch_tile):
    """Tail-balanced, lane-aligned batch tile; >=2 tiles when splittable (v7x)."""
    batch_tile = max(128, _round_up(batch_tile, 128))
    n_tiles = _cdiv(B, batch_tile)
    # v7x megacore: dimension_semantics=("parallel",) only helps if there are >=2
    # grid steps; split any batch that admits two 128-row-aligned tiles.
    if B > 128:
        n_tiles = max(n_tiles, 2)
    # Prefer an even tile count so the two TensorCores stay balanced.
    if n_tiles > 1 and n_tiles % 2 == 1:
        n_tiles += 1
    # Balance the tail: padding bounded to <128 rows per tile (never pad up to a
    # whole extra batch_tile).
    return min(batch_tile, _round_up(_cdiv(B, n_tiles), 128))


def fraud_classifier_forward(m, z, params, *, batch_tile=4096):
    """m: (B, feature_dim), z: (B, latent_dim) -> (B, 1) fraud probability."""
    w1, b1, w2, b2 = params        # PyTorch-native layouts: (64,D), (64,), (1,64), (1,)
    B, Dm = m.shape
    _, Dz = z.shape
    H = w1.shape[0]

    # Split W1 by feature group (kills the concat) and pre-cast the tiny resident
    # weights to bf16 once.  Activations stay in their HBM dtype (f32 or bf16); the
    # kernel casts them in VMEM.
    w1m = w1[:, :Dm].astype(jnp.bfloat16)                  # (H, Dm)
    w1z = w1[:, Dm:].astype(jnp.bfloat16)                  # (H, Dz)
    b1c = b1.reshape(H, 1).astype(jnp.float32)             # column -> lane broadcast
    w2r = w2.reshape(1, H).astype(jnp.bfloat16)            # (1, H)
    b2s = b2.reshape(1).astype(jnp.float32)                # scalar, lives in SMEM

    # Batch tiling: lane-aligned, tail-balanced, >=2 steps for v7x when possible.
    # NOTE (VMEM budget): each (tb, Dm)/(tb, Dz) f32 block is lane-padded to 128, so
    # budget ~tb*512 B per input buffer; tb=4096 double-buffered + temporaries is
    # ~12 MiB and fits v5e's 16 MiB default scoped VMEM.  On v6e, tb=8192 is also
    # fine (bump vmem_limit_bytes a few MiB above the 32 MiB default for safety).
    tb = _choose_batch_tile(B, batch_tile)
    grid_n = _cdiv(B, tb)
    b_pad = grid_n * tb
    if b_pad != B:
        pad = ((0, b_pad - B), (0, 0))
        m = jnp.pad(m, pad)
        z = jnp.pad(z, pad)

    # Advisory cost hint for XLA's scheduler around this tiny, mem-bound kernel.
    in_bytes = b_pad * (Dm * m.dtype.itemsize + Dz * z.dtype.itemsize)
    w_bytes = (w1m.size + w1z.size + w2r.size) * 2 + (b1c.size + b2s.size) * 4
    cost = pl.CostEstimate(
        flops=2 * b_pad * H * (Dm + Dz + 1),
        transcendentals=b_pad,
        bytes_accessed=in_bytes + w_bytes + b_pad * 4,
    )

    out_t = pl.pallas_call(
        _fraud_classifier_kernel,
        out_shape=jax.ShapeDtypeStruct((1, b_pad), jnp.float32),
        grid=(grid_n,),
        in_specs=[
            pl.BlockSpec((tb, Dm), lambda i: (i, 0)),           # m tile   (streamed)
            pl.BlockSpec((tb, Dz), lambda i: (i, 0)),           # z tile   (streamed)
            pl.BlockSpec((H, Dm), lambda i: (0, 0)),            # W1m      (resident)
            pl.BlockSpec((H, Dz), lambda i: (0, 0)),            # W1z      (resident)
            pl.BlockSpec((H, 1), lambda i: (0, 0)),             # b1       (resident)
            pl.BlockSpec((1, H), lambda i: (0, 0)),             # W2       (resident)
            pl.BlockSpec(memory_space=pltpu.MemorySpace.SMEM),  # b2 scalar
        ],
        out_specs=pl.BlockSpec((1, tb), lambda i: (0, i)),      # lane-dense slab
        compiler_params=pltpu.CompilerParams(
            dimension_semantics=("parallel",),                  # v7x: shard over both TCs
        ),
        cost_estimate=cost,
    )(m, z, w1m, w1z, b1c, w2r, b2s)

    # Back to the PyTorch (B, 1) probability column (cheap slice/reshape of
    # contiguous data).
    return out_t[0, :B].reshape(B, 1)


def init_params(key, feature_dim, latent_dim, hidden=64):
    """nn.Linear-style init (uniform +/- 1/sqrt(fan_in)), PyTorch-native layouts."""
    D = feature_dim + latent_dim
    k1, k2, k3, k4 = jax.random.split(key, 4)
    bound1 = 1.0 / np.sqrt(D)
    bound2 = 1.0 / np.sqrt(hidden)
    w1 = jax.random.uniform(k1, (hidden, D), jnp.float32, -bound1, bound1)   # (out, in)
    b1 = jax.random.uniform(k2, (hidden,), jnp.float32, -bound1, bound1)
    w2 = jax.random.uniform(k3, (1, hidden), jnp.float32, -bound2, bound2)
    b2 = jax.random.uniform(k4, (1,), jnp.float32, -bound2, bound2)
    return w1, b1, w2, b2


def reference_forward(m, z, params):
    """Pure-JAX f32 reference for semantics check."""
    w1, b1, w2, b2 = params
    x = jnp.concatenate([m, z], axis=1)
    h = jnp.maximum(x @ w1.T + b1, 0.0)
    return jax.nn.sigmoid(h @ w2.T + b2)


if __name__ == "__main__":
    feature_dim, latent_dim, batch = 24, 8, 8

    key = jax.random.PRNGKey(0)
    kp, km, kz = jax.random.split(key, 3)
    params = init_params(kp, feature_dim, latent_dim)

    m = jax.random.normal(km, (batch, feature_dim), jnp.float32)
    z = jax.random.normal(kz, (batch, latent_dim), jnp.float32)

    out = fraud_classifier_forward(m, z, params)
    out = jax.block_until_ready(out)

    ref = reference_forward(m, z, params)
    assert out.shape == (batch, 1)
    # bf16 MXU matmuls vs the pure-f32 reference.
    np.testing.assert_allclose(np.asarray(out), np.asarray(ref), rtol=2e-2, atol=2e-2)

    # Second check: multi-tile grid (>=2 parallel steps) + balanced-tail padding path.
    batch2 = 300
    km2, kz2 = jax.random.split(jax.random.PRNGKey(1))
    m2 = jax.random.normal(km2, (batch2, feature_dim), jnp.float32)
    z2 = jax.random.normal(kz2, (batch2, latent_dim), jnp.float32)
    out2 = jax.block_until_ready(
        fraud_classifier_forward(m2, z2, params, batch_tile=128))
    ref2 = reference_forward(m2, z2, params)
    assert out2.shape == (batch2, 1)
    np.testing.assert_allclose(np.asarray(out2), np.asarray(ref2), rtol=2e-2, atol=2e-2)

    print("KERNEL_OK")
</pallas_src>

<mosaic_0001>
module attributes {stable_mosaic.version = 11 : i64} {
  func.func @_fraud_classifier_kernel(%arg0: i32, %arg1: memref<128x24xf32, #tpu.memory_space<vmem>>, %arg2: memref<128x8xf32, #tpu.memory_space<vmem>>, %arg3: memref<64x24xbf16, #tpu.memory_space<vmem>>, %arg4: memref<64x8xbf16, #tpu.memory_space<vmem>>, %arg5: memref<64x1xf32, #tpu.memory_space<vmem>>, %arg6: memref<1x64xbf16, #tpu.memory_space<vmem>>, %arg7: memref<1xf32, #tpu.memory_space<smem>>, %arg8: memref<1x128xf32, #tpu.memory_space<vmem>>) attributes {dimension_semantics = [#tpu.dimension_semantics<parallel>], iteration_bounds = array<i64: 1>, scalar_prefetch = 0 : i64, scratch_operands = 0 : i64, tpu.core_type = #tpu.core_type<tc>, window_params = [{transform_indices = @transform_0, window_bounds = array<i64: 128, 24>}, {transform_indices = @transform_1, window_bounds = array<i64: 128, 8>}, {pipeline_mode = #tpu.pipeline_mode<synchronous>, transform_indices = @transform_2, window_bounds = array<i64: 64, 24>}, {pipeline_mode = #tpu.pipeline_mode<synchronous>, transform_indices = @transform_3, window_bounds = array<i64: 64, 8>}, {pipeline_mode = #tpu.pipeline_mode<synchronous>, transform_indices = @transform_4, window_bounds = array<i64: 64, 1>}, {pipeline_mode = #tpu.pipeline_mode<synchronous>, transform_indices = @transform_5, window_bounds = array<i64: 1, 64>}, {transform_indices = @transform_6, window_bounds = array<i64: 1>}, {transform_indices = @transform_7, window_bounds = array<i64: 1, 128>}]} {
    %c0 = arith.constant 0 : index
    %c0_0 = arith.constant 0 : index
    %0 = vector.load %arg1[%c0, %c0_0] : memref<128x24xf32, #tpu.memory_space<vmem>>, vector<128x24xf32>
    %1 = arith.truncf %0 : vector<128x24xf32> to vector<128x24xbf16>
    %c0_1 = arith.constant 0 : index
    %c0_2 = arith.constant 0 : index
    %2 = vector.load %arg2[%c0_1, %c0_2] : memref<128x8xf32, #tpu.memory_space<vmem>>, vector<128x8xf32>
    %3 = arith.truncf %2 : vector<128x8xf32> to vector<128x8xbf16>
    %c0_3 = arith.constant 0 : index
    %c0_4 = arith.constant 0 : index
    %4 = vector.load %arg3[%c0_3, %c0_4] : memref<64x24xbf16, #tpu.memory_space<vmem>>, vector<64x24xbf16>
    %cst = arith.constant dense<0.000000e+00> : vector<64x128xf32>
    %5 = tpu.matmul %4, %1, %cst {dimension_numbers = #tpu.dot_dimension_numbers<[1], [1], [0], [0], [0, 0, 1, 0], [], []>} : vector<64x24xbf16>, vector<128x24xbf16>, vector<64x128xf32> -> vector<64x128xf32>
    %c0_5 = arith.constant 0 : index
    %c0_6 = arith.constant 0 : index
    %6 = vector.load %arg4[%c0_5, %c0_6] : memref<64x8xbf16, #tpu.memory_space<vmem>>, vector<64x8xbf16>
    %cst_7 = arith.constant dense<0.000000e+00> : vector<64x128xf32>
    %7 = tpu.matmul %6, %3, %cst_7 {dimension_numbers = #tpu.dot_dimension_numbers<[1], [1], [0], [0], [0, 0, 1, 0], [], []>} : vector<64x8xbf16>, vector<128x8xbf16>, vector<64x128xf32> -> vector<64x128xf32>
    %8 = arith.addf %5, %7 : vector<64x128xf32>
    %c0_8 = arith.constant 0 : index
    %c0_9 = arith.constant 0 : index
    %9 = vector.load %arg5[%c0_8, %c0_9] : memref<64x1xf32, #tpu.memory_space<vmem>>, vector<64x1xf32>
    %10 = vector.broadcast %9 : vector<64x1xf32> to vector<64x128xf32>
    %11 = arith.addf %8, %10 : vector<64x128xf32>
    %cst_10 = arith.constant 0.000000e+00 : f32
    %12 = vector.broadcast %cst_10 : f32 to vector<64x128xf32>
    %13 = arith.maximumf %11, %12 : vector<64x128xf32>
    %c0_11 = arith.constant 0 : index
    %c0_12 = arith.constant 0 : index
    %14 = vector.load %arg6[%c0_11, %c0_12] : memref<1x64xbf16, #tpu.memory_space<vmem>>, vector<1x64xbf16>
    %15 = arith.truncf %13 : vector<64x128xf32> to vector<64x128xbf16>
    %cst_13 = arith.constant dense<0.000000e+00> : vector<1x128xf32>
    %16 = tpu.matmul %14, %15, %cst_13 {dimension_numbers = #tpu.dot_dimension_numbers<[1], [0], [0], [1], [0, 0, 1, 1], [], []>} : vector<1x64xbf16>, vector<64x128xbf16>, vector<1x128xf32> -> vector<1x128xf32>
    %c0_14 = arith.constant 0 : index
    %17 = memref.load %arg7[%c0_14] : memref<1xf32, #tpu.memory_space<smem>>
    %18 = vector.broadcast %17 : f32 to vector<1x128xf32>
    %19 = arith.addf %16, %18 : vector<1x128xf32>
    %20 = math.absf %19 : vector<1x128xf32>
    %cst_15 = arith.constant 0.000000e+00 : f32
    %21 = vector.broadcast %cst_15 : f32 to vector<1x128xf32>
    %22 = arith.subf %21, %20 : vector<1x128xf32>
    %23 = math.exp %22 : vector<1x128xf32>
    %cst_16 = arith.constant 1.000000e+00 : f32
    %24 = vector.broadcast %cst_16 : f32 to vector<1x128xf32>
    %25 = arith.addf %24, %23 : vector<1x128xf32>
    %26 = tpu.reciprocal %25 : vector<1x128xf32> -> vector<1x128xf32>
    %cst_17 = arith.constant 0.000000e+00 : f32
    %27 = vector.broadcast %cst_17 : f32 to vector<1x128xf32>
    %28 = arith.cmpf oge, %19, %27 : vector<1x128xf32>
    %cst_18 = arith.constant 1.000000e+00 : f32
    %29 = vector.broadcast %cst_18 : f32 to vector<1x128xf32>
    %30 = arith.subf %29, %26 : vector<1x128xf32>
    %31 = arith.select %28, %26, %30 : vector<1x128xi1>, vector<1x128xf32>
    %c0_19 = arith.constant 0 : index
    %c0_20 = arith.constant 0 : index
    %32 = vector.load %arg8[%c0_19, %c0_20] : memref<1x128xf32, #tpu.memory_space<vmem>>, vector<1x128xf32>
    tpu.vector_store %arg8[%c0_19, %c0_20], %31 {strides = array<i32>} : memref<1x128xf32, #tpu.memory_space<vmem>>, vector<1x128xf32>,
    return
  }
  func.func @transform_0(%arg0: i32) -> (i32, i32) {
    %c0_i32 = arith.constant 0 : i32
    %c0_i32_0 = arith.constant 0 : i32
    return %arg0, %c0_i32 : i32, i32
  }
  func.func @transform_1(%arg0: i32) -> (i32, i32) {
    %c0_i32 = arith.constant 0 : i32
    %c0_i32_0 = arith.constant 0 : i32
    return %arg0, %c0_i32 : i32, i32
  }
  func.func @transform_2(%arg0: i32) -> (i32, i32) {
    %c0_i32 = arith.constant 0 : i32
    %c0_i32_0 = arith.constant 0 : i32
    %c0_i32_1 = arith.constant 0 : i32
    return %c0_i32, %c0_i32_0 : i32, i32
  }
  func.func @transform_3(%arg0: i32) -> (i32, i32) {
    %c0_i32 = arith.constant 0 : i32
    %c0_i32_0 = arith.constant 0 : i32
    %c0_i32_1 = arith.constant 0 : i32
    return %c0_i32, %c0_i32_0 : i32, i32
  }
  func.func @transform_4(%arg0: i32) -> (i32, i32) {
    %c0_i32 = arith.constant 0 : i32
    %c0_i32_0 = arith.constant 0 : i32
    %c0_i32_1 = arith.constant 0 : i32
    return %c0_i32, %c0_i32_0 : i32, i32
  }
  func.func @transform_5(%arg0: i32) -> (i32, i32) {
    %c0_i32 = arith.constant 0 : i32
    %c0_i32_0 = arith.constant 0 : i32
    %c0_i32_1 = arith.constant 0 : i32
    return %c0_i32, %c0_i32_0 : i32, i32
  }
  func.func @transform_6(%arg0: i32) -> i32 {
    %c0_i32 = arith.constant 0 : i32
    %c0_i32_0 = arith.constant 0 : i32
    return %c0_i32 : i32
  }
  func.func @transform_7(%arg0: i32) -> (i32, i32) {
    %c0_i32 = arith.constant 0 : i32
    %c0_i32_0 = arith.constant 0 : i32
    return %c0_i32, %arg0 : i32, i32
  }
}

</mosaic_0001>

<llo_original>
// kernel: tpu_custom_call.1
$region0: #{tpu_custom_call.1}
  #allocation0 [shape = 'u32[]', space=smem, size = 0x4, offset = 0x4, fixed_abs, tag = 'smem constant byte address 0x4 - core index']
  #allocation1 [shape = 'u32[144,128]{1,0:T(1,128)}', space=vmem, size = 0x12000, scoped, tag = 'internal scratch']
  #allocation2 [shape = 'f32[1]{0:T(128)S(6)}', space=smem, size = 0x200, scoped, tag = 'scoped memory for tpu_custom_call.1']
  %s0 = inlined_call_operand.vmem [shape: f32[128,24], index: 0, kind: input, shape index: {}]
  %s1 = inlined_call_operand.vmem [shape: f32[128,8], index: 1, kind: input, shape index: {}]
  %s2 = inlined_call_operand.vmem [shape: bf16[64,24], index: 2, kind: input, shape index: {}]
  %s3 = inlined_call_operand.vmem [shape: bf16[64,8], index: 3, kind: input, shape index: {}]
  %s4 = inlined_call_operand.vmem [shape: f32[64,1], index: 4, kind: input, shape index: {}]
  %s5 = inlined_call_operand.vmem [shape: bf16[1,64], index: 5, kind: input, shape index: {}]
  %s6 = inlined_call_operand.<no memory space> [shape: f32[1], index: 6, kind: input, shape index: {}]
  %s7 = inlined_call_operand.hbm [shape: f32[1,128], index: 7, kind: output, shape index: {}]
  %s8 = sld [smem:[#allocation0]]
  $region38: #{tpu_custom_call.1} parent=0
    _
  %s10 = ssub.s32 1, %s8
  %s11 = scalar_select 0, %s10, %s8
  %12 = sst [smem:[#allocation2]] %s6
  $region1: #{tpu_custom_call.1} parent=0
    #allocation3 [shape = 'u8[512]{0}', space=vmem, size = 0x400, scoped, tag = 'output window, operand 0, single buffered']
    #allocation4 [shape = 's32[1]{0}', space=sflag, size = 0x4, scoped, tag = 'scoped memory for tpu_custom_call.1']
    %13 = vsyncpa [#allocation4], 0
    // Predicated region
    $region2: #{tpu_custom_call.1} parent=1 // pred_check
      _
    $region3: #{tpu_custom_call.1} parent=1 // pred_check_branch
      %15 = sbr.rel (0) target = $region5
    $region4: #{tpu_custom_call.1} parent=1 // pred_region
      _
    $region5: #{tpu_custom_call.1} parent=1 // pred_fallthru
      _
    // Predicated region
    $region6: #{tpu_custom_call.1} parent=1 // pred_check
      _
    $region7: #{tpu_custom_call.1} parent=1 // pred_check_branch
      %17 = sbr.rel (0) target = $region9
    $region8: #{tpu_custom_call.1} parent=1 // pred_region
      _
    $region9: #{tpu_custom_call.1} parent=1 // pred_fallthru
      _
    // Predicated region
    $region10: #{tpu_custom_call.1} parent=1 // pred_check
      _
    $region11: #{tpu_custom_call.1} parent=1 // pred_check_branch
      %19 = sbr.rel (0) target = $region13
    $region12: #{tpu_custom_call.1} parent=1 // pred_region
      _
    $region13: #{tpu_custom_call.1} parent=1 // pred_fallthru
      _
    // Predicated region
    $region14: #{tpu_custom_call.1} parent=1 // pred_check
      _
    $region15: #{tpu_custom_call.1} parent=1 // pred_check_branch
      %21 = sbr.rel (0) target = $region17
    $region16: #{tpu_custom_call.1} parent=1 // pred_region
      _
    $region17: #{tpu_custom_call.1} parent=1 // pred_fallthru
      _
    // Predicated region
    $region18: #{tpu_custom_call.1} parent=1 // pred_check
      _
    $region19: #{tpu_custom_call.1} parent=1 // pred_check_branch
      %23 = sbr.rel (0) target = $region21
    $region20: #{tpu_custom_call.1} parent=1 // pred_region
      _
    $region21: #{tpu_custom_call.1} parent=1 // pred_fallthru
      _
    // Predicated region
    $region22: #{tpu_custom_call.1} parent=1 // pred_check
      _
    $region23: #{tpu_custom_call.1} parent=1 // pred_check_branch
      %25 = sbr.rel (0) target = $region25
    $region24: #{tpu_custom_call.1} parent=1 // pred_region
      _
    $region25: #{tpu_custom_call.1} parent=1 // pred_fallthru
      _
    // Predicated region
    $region26: #{tpu_custom_call.1} parent=1 // pred_check
      _
    $region27: #{tpu_custom_call.1} parent=1 // pred_check_branch
      %27 = sbr.rel (0) target = $region29
    $region28: #{tpu_custom_call.1} parent=1 // pred_region
      _
    $region29: #{tpu_custom_call.1} parent=1 // pred_fallthru
      _
    %v29 = vld [vmem:[%s0] sm:$0xff]
    %v30 = vld [vmem:[%s0 + $0x8] sm:$0xff]
    %v31 = vld [vmem:[%s0 + $0x10] sm:$0xff]
    %v32 = vld [vmem:[%s0 + $0x18] sm:$0xff]
    %v33 = vld [vmem:[%s0 + $0x20] sm:$0xff]
    %v34 = vld [vmem:[%s0 + $0x28] sm:$0xff]
    %v35 = vld [vmem:[%s0 + $0x30] sm:$0xff]
    %v36 = vld [vmem:[%s0 + $0x38] sm:$0xff]
    %v37 = vld [vmem:[%s0 + $0x40] sm:$0xff]
    %v38 = vld [vmem:[%s0 + $0x48] sm:$0xff]
    %v39 = vld [vmem:[%s0 + $0x50] sm:$0xff]
    %v40 = vld [vmem:[%s0 + $0x58] sm:$0xff]
    %v41 = vld [vmem:[%s0 + $0x60] sm:$0xff]
    %v42 = vld [vmem:[%s0 + $0x68] sm:$0xff]
    %v43 = vld [vmem:[%s0 + $0x70] sm:$0xff]
    %v44 = vld [vmem:[%s0 + $0x78] sm:$0xff]
    %v45 = vpack.c.bf16 %v30, %v29
    %v46 = vpack.c.bf16 %v32, %v31
    %v47 = vpack.c.bf16 %v34, %v33
    %v48 = vpack.c.bf16 %v36, %v35
    %v49 = vpack.c.bf16 %v38, %v37
    %v50 = vpack.c.bf16 %v40, %v39
    %v51 = vpack.c.bf16 %v42, %v41
    %v52 = vpack.c.bf16 %v44, %v43
    %v53 = vld [vmem:[%s1] sm:$0xff]
    %v54 = vld [vmem:[%s1 + $0x8] sm:$0xff]
    %v55 = vld [vmem:[%s1 + $0x10] sm:$0xff]
    %v56 = vld [vmem:[%s1 + $0x18] sm:$0xff]
    %v57 = vld [vmem:[%s1 + $0x20] sm:$0xff]
    %v58 = vld [vmem:[%s1 + $0x28] sm:$0xff]
    %v59 = vld [vmem:[%s1 + $0x30] sm:$0xff]
    %v60 = vld [vmem:[%s1 + $0x38] sm:$0xff]
    %v61 = vld [vmem:[%s1 + $0x40] sm:$0xff]
    %v62 = vld [vmem:[%s1 + $0x48] sm:$0xff]
    %v63 = vld [vmem:[%s1 + $0x50] sm:$0xff]
    %v64 = vld [vmem:[%s1 + $0x58] sm:$0xff]
    %v65 = vld [vmem:[%s1 + $0x60] sm:$0xff]
    %v66 = vld [vmem:[%s1 + $0x68] sm:$0xff]
    %v67 = vld [vmem:[%s1 + $0x70] sm:$0xff]
    %v68 = vld [vmem:[%s1 + $0x78] sm:$0xff]
    %v69 = vpack.c.bf16 %v54, %v53
    %v70 = vpack.c.bf16 %v56, %v55
    %v71 = vpack.c.bf16 %v58, %v57
    %v72 = vpack.c.bf16 %v60, %v59
    %v73 = vpack.c.bf16 %v62, %v61
    %v74 = vpack.c.bf16 %v64, %v63
    %v75 = vpack.c.bf16 %v66, %v65
    %v76 = vpack.c.bf16 %v68, %v67
    %v77 = vld [vmem:[%s2] sm:$0xf]
    %v78 = vld [vmem:[%s2 + $0x4] sm:$0xf]
    %v79 = vld [vmem:[%s2 + $0x8] sm:$0xf]
    %v80 = vld [vmem:[%s2 + $0xc] sm:$0xf]
    %v81 = vld [vmem:[%s2 + $0x10] sm:$0xf]
    %v82 = vld [vmem:[%s2 + $0x14] sm:$0xf]
    %v83 = vld [vmem:[%s2 + $0x18] sm:$0xf]
    %v84 = vld [vmem:[%s2 + $0x1c] sm:$0xf]
    %v85 = vld [vmem:[%s3] sm:$0xf]
    %v86 = vld [vmem:[%s3 + $0x4] sm:$0xf]
    %v87 = vld [vmem:[%s3 + $0x8] sm:$0xf]
    %v88 = vld [vmem:[%s3 + $0xc] sm:$0xf]
    %v89 = vld [vmem:[%s3 + $0x10] sm:$0xf]
    %v90 = vld [vmem:[%s3 + $0x14] sm:$0xf]
    %v91 = vld [vmem:[%s3 + $0x18] sm:$0xf]
    %v92 = vld [vmem:[%s3 + $0x1c] sm:$0xf]
    %v101 = vunpack.c.l.b16 %v85
    %v102 = vunpack.c.l.b16 %v86
    %v103 = vunpack.c.l.b16 %v87
    %v104 = vunpack.c.l.b16 %v88
    %v105 = vunpack.c.l.b16 %v89
    %v106 = vunpack.c.l.b16 %v90
    %v107 = vunpack.c.l.b16 %v91
    %v108 = vunpack.c.l.b16 %v92
    %v109 = vpack.c.b16 %v102, %v101
    %v110 = vpack.c.b16 %v104, %v103
    %v111 = vpack.c.b16 %v106, %v105
    %v112 = vpack.c.b16 %v108, %v107
    %vm113 = vcmask 64512
    %v115 = vsel %vm113, %v109, 0
    %v118 = vsel %vm113, %v110, 0
    %v121 = vsel %vm113, %v111, 0
    %v124 = vsel %vm113, %v112, 0
    %v127 = vsel %vm113, %v69, 0
    %v130 = vsel %vm113, %v70, 0
    %v133 = vsel %vm113, %v71, 0
    %v136 = vsel %vm113, %v72, 0
    %v139 = vsel %vm113, %v73, 0
    %v142 = vsel %vm113, %v74, 0
    %v145 = vsel %vm113, %v75, 0
    %v148 = vsel %vm113, %v76, 0
    %150 = vmatprep.subr.bf16.mxu0 0
    %151 = vmatpush1.bf16.xpose.msra.mxu0 %v127
    %152 = vmatprep.subr.bf16.mxu0 0
    %153 = vmatpush1.bf16.xpose.msra.mxu0 %v130
    %154 = vmatprep.subr.bf16.mxu0 0
    %155 = vmatpush1.bf16.xpose.msra.mxu0 %v133
    %156 = vmatprep.subr.bf16.mxu0 0
    %157 = vmatpush1.bf16.xpose.msra.mxu0 %v136
    %158 = vmatprep.subr.bf16.mxu0 0
    %159 = vmatpush1.bf16.xpose.msra.mxu0 %v139
    %160 = vmatprep.subr.bf16.mxu0 0
    %161 = vmatpush1.bf16.xpose.msra.mxu0 %v142
    %162 = vmatprep.subr.bf16.mxu0 0
    %163 = vmatpush1.bf16.xpose.msra.mxu0 %v145
    %164 = vmatprep.subr.bf16.mxu0 0
    %165 = vmatpush1.bf16.xpose.msra.mxu0 %v148
    %166 = vmatprep.subr.bf16.mxu0 0
    %167 = vmatpush1.bf16.xpose.msra.mxu0 0
    %168 = vmatprep.subr.bf16.mxu0 0
    %169 = vmatpush1.bf16.xpose.msra.mxu0 0
    %170 = vmatprep.subr.bf16.mxu0 0
    %171 = vmatpush1.bf16.xpose.msra.mxu0 0
    %172 = vmatprep.subr.bf16.mxu0 0
    %173 = vmatpush1.bf16.xpose.msra.mxu0 0
    %174 = vmatprep.subr.bf16.mxu0 0
    %175 = vmatpush1.bf16.xpose.msra.mxu0 0
    %176 = vmatprep.subr.bf16.mxu0 0
    %177 = vmatpush1.bf16.xpose.msra.mxu0 0
    %178 = vmatprep.subr.bf16.mxu0 0
    %179 = vmatpush1.bf16.xpose.msra.mxu0 0
    %180 = vmatprep.subr.bf16.mxu0 0
    %181 = vmatpush1.bf16.xpose.msra.mxu0 0
    %182 = vmatprep.mubr.bf16.mxu0 0
    %183 = vmatmul.mubr.bf16.gmra.mrb[0].mxu0 %v115
    %v184 = vpop.f32.mrb[0].mxu0
    %v185 = vadd.f32 0.0, %v184
    %v186 = vpop.f32.mrb[0].mxu0
    %v187 = vpop.f32.mrb[0].mxu0
    %v188 = vadd.f32 0.0, %v187
    %v189 = vpop.f32.mrb[0].mxu0
    %190 = vmatprep.mubr.bf16.mxu0 0
    %191 = vmatmul.mubr.bf16.gmra.mrb[0].mxu0 %v118
    %v192 = vpop.f32.mrb[0].mxu0
    %v193 = vadd.f32 0.0, %v192
    %v194 = vpop.f32.mrb[0].mxu0
    %v195 = vpop.f32.mrb[0].mxu0
    %v196 = vadd.f32 0.0, %v195
    %v197 = vpop.f32.mrb[0].mxu0
    %198 = vmatprep.mubr.bf16.mxu0 0
    %199 = vmatmul.mubr.bf16.gmra.mrb[0].mxu0 %v121
    %v200 = vpop.f32.mrb[0].mxu0
    %v201 = vadd.f32 0.0, %v200
    %v202 = vpop.f32.mrb[0].mxu0
    %v203 = vpop.f32.mrb[0].mxu0
    %v204 = vadd.f32 0.0, %v203
    %v205 = vpop.f32.mrb[0].mxu0
    %206 = vmatprep.mubr.bf16.mxu0 0
    %207 = vmatmul.mubr.bf16.gmra.mrb[0].mxu0 %v124
    %v208 = vpop.f32.mrb[0].mxu0
    %v209 = vadd.f32 0.0, %v208
    %v210 = vpop.f32.mrb[0].mxu0
    %v211 = vpop.f32.mrb[0].mxu0
    %v212 = vadd.f32 0.0, %v211
    %v213 = vpop.f32.mrb[0].mxu0
    %214 = vdwg.mxu0
    %v223 = vunpack.c.l.b16 %v77
    %v224 = vunpack.c.l.b16 %v78
    %v225 = vunpack.c.l.b16 %v79
    %v226 = vunpack.c.l.b16 %v80
    %v227 = vunpack.c.l.b16 %v81
    %v228 = vunpack.c.l.b16 %v82
    %v229 = vunpack.c.l.b16 %v83
    %v230 = vunpack.c.l.b16 %v84
    %v231 = vpack.c.b16 %v224, %v223
    %v232 = vpack.c.b16 %v226, %v225
    %v233 = vpack.c.b16 %v228, %v227
    %v234 = vpack.c.b16 %v230, %v229
    %vm235 = vcmask 195584
    %v237 = vsel %vm235, %v231, 0
    %v240 = vsel %vm235, %v232, 0
    %v243 = vsel %vm235, %v233, 0
    %v246 = vsel %vm235, %v234, 0
    %v249 = vsel %vm235, %v45, 0
    %v252 = vsel %vm235, %v46, 0
    %v255 = vsel %vm235, %v47, 0
    %v258 = vsel %vm235, %v48, 0
    %v261 = vsel %vm235, %v49, 0
    %v264 = vsel %vm235, %v50, 0
    %v267 = vsel %vm235, %v51, 0
    %v270 = vsel %vm235, %v52, 0
    %272 = vmatprep.subr.bf16.mxu0 0
    %273 = vmatpush1.bf16.xpose.msra.mxu0 %v249
    %274 = vmatprep.subr.bf16.mxu0 0
    %275 = vmatpush1.bf16.xpose.msra.mxu0 %v252
    %276 = vmatprep.subr.bf16.mxu0 0
    %277 = vmatpush1.bf16.xpose.msra.mxu0 %v255
    %278 = vmatprep.subr.bf16.mxu0 0
    %279 = vmatpush1.bf16.xpose.msra.mxu0 %v258
    %280 = vmatprep.subr.bf16.mxu0 0
    %281 = vmatpush1.bf16.xpose.msra.mxu0 %v261
    %282 = vmatprep.subr.bf16.mxu0 0
    %283 = vmatpush1.bf16.xpose.msra.mxu0 %v264
    %284 = vmatprep.subr.bf16.mxu0 0
    %285 = vmatpush1.bf16.xpose.msra.mxu0 %v267
    %286 = vmatprep.subr.bf16.mxu0 0
    %287 = vmatpush1.bf16.xpose.msra.mxu0 %v270
    %288 = vmatprep.subr.bf16.mxu0 0
    %289 = vmatpush1.bf16.xpose.msra.mxu0 0
    %290 = vmatprep.subr.bf16.mxu0 0
    %291 = vmatpush1.bf16.xpose.msra.mxu0 0
    %292 = vmatprep.subr.bf16.mxu0 0
    %293 = vmatpush1.bf16.xpose.msra.mxu0 0
    %294 = vmatprep.subr.bf16.mxu0 0
    %295 = vmatpush1.bf16.xpose.msra.mxu0 0
    %296 = vmatprep.subr.bf16.mxu0 0
    %297 = vmatpush1.bf16.xpose.msra.mxu0 0
    %298 = vmatprep.subr.bf16.mxu0 0
    %299 = vmatpush1.bf16.xpose.msra.mxu0 0
    %300 = vmatprep.subr.bf16.mxu0 0
    %301 = vmatpush1.bf16.xpose.msra.mxu0 0
    %302 = vmatprep.subr.bf16.mxu0 0
    %303 = vmatpush1.bf16.xpose.msra.mxu0 0
    %304 = vmatprep.mubr.bf16.mxu0 0
    %305 = vmatmul.mubr.bf16.gmra.mrb[0].mxu0 %v237
    %v306 = vpop.f32.mrb[0].mxu0
    %v307 = vadd.f32 %v185, %v306
    %v308 = vpop.f32.mrb[0].mxu0
    %v309 = vpop.f32.mrb[0].mxu0
    %v310 = vadd.f32 %v188, %v309
    %v311 = vpop.f32.mrb[0].mxu0
    %312 = vmatprep.mubr.bf16.mxu0 0
    %313 = vmatmul.mubr.bf16.gmra.mrb[0].mxu0 %v240
    %v314 = vpop.f32.mrb[0].mxu0
    %v315 = vadd.f32 %v193, %v314
    %v316 = vpop.f32.mrb[0].mxu0
    %v317 = vpop.f32.mrb[0].mxu0
    %v318 = vadd.f32 %v196, %v317
    %v319 = vpop.f32.mrb[0].mxu0
    %320 = vmatprep.mubr.bf16.mxu0 0
    %321 = vmatmul.mubr.bf16.gmra.mrb[0].mxu0 %v243
    %v322 = vpop.f32.mrb[0].mxu0
    %v323 = vadd.f32 %v201, %v322
    %v324 = vpop.f32.mrb[0].mxu0
    %v325 = vpop.f32.mrb[0].mxu0
    %v326 = vadd.f32 %v204, %v325
    %v327 = vpop.f32.mrb[0].mxu0
    %328 = vmatprep.mubr.bf16.mxu0 0
    %329 = vmatmul.mubr.bf16.gmra.mrb[0].mxu0 %v246
    %v330 = vpop.f32.mrb[0].mxu0
    %v331 = vadd.f32 %v209, %v330
    %v332 = vpop.f32.mrb[0].mxu0
    %v333 = vpop.f32.mrb[0].mxu0
    %v334 = vadd.f32 %v212, %v333
    %v335 = vpop.f32.mrb[0].mxu0
    %336 = vdwg.mxu0
    %v337 = vld [vmem:[%s4] sm:$0xff]
    %v338 = vld [vmem:[%s4 + $0x8] sm:$0xff]
    %v339 = vld [vmem:[%s4 + $0x10] sm:$0xff]
    %v340 = vld [vmem:[%s4 + $0x18] sm:$0xff]
    %v341 = vld [vmem:[%s4 + $0x20] sm:$0xff]
    %v342 = vld [vmem:[%s4 + $0x28] sm:$0xff]
    %v343 = vld [vmem:[%s4 + $0x30] sm:$0xff]
    %v344 = vld [vmem:[%s4 + $0x38] sm:$0xff]
    %346 = vset.pattern.permute.xlu0 0
    %347 = vperm.xlu0 %346, %v337
    %v348 = vpop.permute.xlu0 %347
    %351 = vset.pattern.permute.xlu0 0
    %352 = vperm.xlu0 %351, %v338
    %v353 = vpop.permute.xlu0 %352
    %356 = vset.pattern.permute.xlu0 0
    %357 = vperm.xlu0 %356, %v339
    %v358 = vpop.permute.xlu0 %357
    %361 = vset.pattern.permute.xlu0 0
    %362 = vperm.xlu0 %361, %v340
    %v363 = vpop.permute.xlu0 %362
    %366 = vset.pattern.permute.xlu0 0
    %367 = vperm.xlu0 %366, %v341
    %v368 = vpop.permute.xlu0 %367
    %371 = vset.pattern.permute.xlu0 0
    %372 = vperm.xlu0 %371, %v342
    %v373 = vpop.permute.xlu0 %372
    %376 = vset.pattern.permute.xlu0 0
    %377 = vperm.xlu0 %376, %v343
    %v378 = vpop.permute.xlu0 %377
    %381 = vset.pattern.permute.xlu0 0
    %382 = vperm.xlu0 %381, %v344
    %v383 = vpop.permute.xlu0 %382
    %v385 = vadd.f32 %v307, %v348
    %v386 = vadd.f32 %v310, %v353
    %v387 = vadd.f32 %v315, %v358
    %v388 = vadd.f32 %v318, %v363
    %v389 = vadd.f32 %v323, %v368
    %v390 = vadd.f32 %v326, %v373
    %v391 = vadd.f32 %v331, %v378
    %v392 = vadd.f32 %v334, %v383
    %v393 = vmax.f32 %v385, 0.0
    %v394 = vmax.f32 %v386, 0.0
    %v395 = vmax.f32 %v387, 0.0
    %v396 = vmax.f32 %v388, 0.0
    %v397 = vmax.f32 %v389, 0.0
    %v398 = vmax.f32 %v390, 0.0
    %v399 = vmax.f32 %v391, 0.0
    %v400 = vmax.f32 %v392, 0.0
    %v401 = vld [vmem:[%s5] sm:$0x1]
    %v402 = vpack.c.bf16 %v394, %v393
    %v403 = vpack.c.bf16 %v396, %v395
    %v404 = vpack.c.bf16 %v398, %v397
    %v405 = vpack.c.bf16 %v400, %v399
    %s406 = sld [smem:[#allocation2]]
    %v407 = vstv %s406
    %vm408 = vcmask 523264
    %v410 = vsel %vm408, %v401, 0
    %412 = vmatprep.subr.bf16.mxu0 0
    %413 = vmatpush1.bf16.msra.mxu0 %v402
    %414 = vmatprep.subr.bf16.mxu0 0
    %415 = vmatpush1.bf16.msra.mxu0 %v403
    %416 = vmatprep.subr.bf16.mxu0 0
    %417 = vmatpush1.bf16.msra.mxu0 %v404
    %418 = vmatprep.subr.bf16.mxu0 0
    %419 = vmatpush1.bf16.msra.mxu0 %v405
    %420 = vmatprep.subr.bf16.mxu0 0
    %421 = vmatpush1.bf16.msra.mxu0 0
    %422 = vmatprep.subr.bf16.mxu0 0
    %423 = vmatpush1.bf16.msra.mxu0 0
    %424 = vmatprep.subr.bf16.mxu0 0
    %425 = vmatpush1.bf16.msra.mxu0 0
    %426 = vmatprep.subr.bf16.mxu0 0
    %427 = vmatpush1.bf16.msra.mxu0 0
    %428 = vmatprep.subr.bf16.mxu0 0
    %429 = vmatpush1.bf16.msra.mxu0 0
    %430 = vmatprep.subr.bf16.mxu0 0
    %431 = vmatpush1.bf16.msra.mxu0 0
    %432 = vmatprep.subr.bf16.mxu0 0
    %433 = vmatpush1.bf16.msra.mxu0 0
    %434 = vmatprep.subr.bf16.mxu0 0
    %435 = vmatpush1.bf16.msra.mxu0 0
    %436 = vmatprep.subr.bf16.mxu0 0
    %437 = vmatpush1.bf16.msra.mxu0 0
    %438 = vmatprep.subr.bf16.mxu0 0
    %439 = vmatpush1.bf16.msra.mxu0 0
    %440 = vmatprep.subr.bf16.mxu0 0
    %441 = vmatpush1.bf16.msra.mxu0 0
    %442 = vmatprep.subr.bf16.mxu0 0
    %443 = vmatpush1.bf16.msra.mxu0 0
    %444 = vmatprep.mubr.bf16.mxu0 0
    %445 = vmatmul.mubr.bf16.gmra.mrb[0].mxu0 %v410
    %v446 = vpop.f32.mrb[0].mxu0
    %v447 = vadd.f32 %v407, %v446
    %v448 = vpop.f32.mrb[0].mxu0
    %v449 = vpop.f32.mrb[0].mxu0
    %v450 = vpop.f32.mrb[0].mxu0
    %451 = vdwg.mxu0
    %v452 = vand.u32 2147483647, %v447
    %v453 = vsub.f32 0.0, %v452
    %v454 = vmul.f32 %v453, 1.442695
    %v455 = vpow.pop %v454
    %v456 = vadd.f32 %v455, 1.0
    %v457 = vrcp.pop %v456
    %vm458 = vcmp.ge.f32.partialorder %v447, 0.0
    %v459 = vsub.f32 1.0, %v457
    %v460 = vsel %vm458, %v457, %v459
    %461 = vst [vmem:[#allocation3] sm:$0x1] %v460
    // Predicated region
    $region30: #{tpu_custom_call.1} parent=1 // pred_check
      _
    $region31: #{tpu_custom_call.1} parent=1 // pred_check_branch
      %463 = sbr.rel (0) target = $region33
    $region32: #{tpu_custom_call.1} parent=1 // pred_region
      %s465 = ssub.s32 16, 16
      %466 = vsyncadd [#allocation4], %s465
      %s468 = sshll.u32 [#allocation3], 4
      %s469 = int_to_ptr.vmem [resolvable:$true] %s468
      %471 = dma.vmem_to_hbm [thread:$0]  %s469, 16, %s7, [#allocation4]
    $region33: #{tpu_custom_call.1} parent=1 // pred_fallthru
      _
    // Predicated region
    $region34: #{tpu_custom_call.1} parent=1 // pred_check
      _
    $region35: #{tpu_custom_call.1} parent=1 // pred_check_branch
      %473 = sbr.rel (0) target = $region37
    $region36: #{tpu_custom_call.1} parent=1 // pred_region
      %474 = dma.done [#allocation4], 16
    $region37: #{tpu_custom_call.1} parent=1 // pred_fallthru
      _
    %475 = vsyncpa [#allocation4], 1

</llo_original>
